<compile_context>
chip_gen: v5e
topology: v5e:2x2
jax: 0.10.0
libtpu: 0.0.40
codegen_flags: <defaults>
</compile_context>

<pallas_src>
import functools

import jax
import jax.numpy as jnp
from jax import lax
from jax.experimental import pallas as pl
from jax.experimental.pallas import tpu as pltpu


# ----------------------------------------------------------------------------
# Fused kernel
# ----------------------------------------------------------------------------

def _pamd_fused_kernel(x_ref, o_ref, acc_pooled, acc_alpha, *,
                       G, D, ho, wo, win, eps):
    # x_ref : (D*ho*win, wo, win, C)        -- one (b, g) slab, channels on lanes
    # o_ref : ((1+G)*ho, win, wo, win, C)   -- the full output slab for batch b,
    #                                          resident in VMEM across the g axis
    # acc_pooled : (ho, 1, wo, 1, C) f32 scratch  (sum over g of pooled cls maps)
    # acc_alpha  : (ho, 1, wo, 1, 1) f32 scratch  (sum over g of per-group alphas)
    g = pl.program_id(1)
    c = x_ref.shape[-1]

    x = x_ref[...].astype(jnp.float32)
    # Leading-dim-only reshape (minor (win, C) dims untouched) -> free, no relayout.
    x = x.reshape(D, ho, win, wo, win, c)

    # ---- temporal mean over the D-1 non-cls slices -> output slot g+1 -------
    mean = jnp.sum(x[1:], axis=0) * (1.0 / float(D - 1))      # (ho, win, wo, win, C)
    slot = pl.multiple_of((g + 1) * ho, ho)
    o_ref[pl.ds(slot, ho)] = mean.astype(o_ref.dtype)

    # ---- cls path: AvgPool3d (1, win, win), keepdims so every later op is a
    #      lane-preserving sublane / leading-dim broadcast --------------------
    cls = x[0]                                                 # (ho, win, wo, win, C)
    pooled = jnp.sum(cls, axis=3, keepdims=True)               # (ho, win, wo, 1, C)
    pooled = jnp.sum(pooled, axis=1, keepdims=True)            # (ho, 1,   wo, 1, C)
    pooled = pooled * (1.0 / float(win * win))

    # merge_cls per-group alpha: alpha_i = sum_{j != i} n_i . n_j
    #                                    = n_i . (sum_j n_j - n_i)
    sq = jnp.sum(pooled * pooled, axis=-1, keepdims=True)      # (ho,1,wo,1,1)
    n = pooled * lax.rsqrt(sq + eps)                            # unit vectors over C
    colsum = jnp.sum(jnp.sum(n, axis=2, keepdims=True), axis=0, keepdims=True)
    alpha_g = jnp.sum(n * (colsum - n), axis=-1, keepdims=True)  # (ho,1,wo,1,1)

    # ---- accumulate the cls statistics across the g (arbitrary) axis --------
    @pl.when(g == 0)
    def _():
        acc_pooled[...] = jnp.zeros_like(acc_pooled)
        acc_alpha[...] = jnp.zeros_like(acc_alpha)

    acc_pooled[...] += pooled
    acc_alpha[...] += alpha_g

    # ---- finalize on the last group: softmax over the ho*wo positions,
    #      weighted merge, x7 nearest upsample (pure broadcast) -> slot 0 -----
    @pl.when(g == G - 1)
    def _():
        a = acc_alpha[...]                                      # (ho,1,wo,1,1)
        m = jnp.max(jnp.max(a, axis=2, keepdims=True), axis=0, keepdims=True)
        e = jnp.exp(a - m)
        z = jnp.sum(jnp.sum(e, axis=2, keepdims=True), axis=0, keepdims=True)
        w = e / z                                               # softmax weights
        merged = acc_pooled[...] * w                            # (ho,1,wo,1,C)
        up = jnp.broadcast_to(merged, (ho, win, wo, win, c))    # x7 nearest upsample
        o_ref[pl.ds(0, ho)] = up.astype(o_ref.dtype)


# ----------------------------------------------------------------------------
# Wrapper
# ----------------------------------------------------------------------------

def pamd_forward(x, *, window=7, eps=1e-12):
    """PAMD forward.  x: (B, G, D, H, W, C) channels-last  ->  (B, 1+G, H, W, C)."""
    B, G, D, H, W, C = x.shape
    win = window
    ho, wo = H // win, W // win
    assert ho * win == H and wo * win == W, "H, W must be multiples of the window"
    assert D >= 2, "need at least one non-cls temporal slice"

    # Free contiguous reshapes: pre-split H, W into (ho, 7) x (wo, 7) so the
    # pooling / upsample never touch the lane axis and the kernel needs no
    # relayouts.  (D, ho, win) fold onto one leading axis to keep blocks rank-6.
    xr = x.reshape(B, G, D * ho * win, wo, win, C)

    itemsize = jnp.dtype(x.dtype).itemsize
    in_block = D * H * W * C * itemsize            # one (b, g) slab
    out_block = (1 + G) * H * W * C * itemsize     # resident output slab per b
    vmem_needed = 2 * in_block + 2 * out_block + (1 << 20)
    vmem_limit = int(min(max(vmem_needed, 32 * 1024 * 1024), 100 * 1024 * 1024))

    kernel = functools.partial(
        _pamd_fused_kernel, G=G, D=D, ho=ho, wo=wo, win=win, eps=eps)

    out = pl.pallas_call(
        kernel,
        out_shape=jax.ShapeDtypeStruct((B, (1 + G) * ho, win, wo, win, C), x.dtype),
        grid=(B, G),
        in_specs=[
            pl.BlockSpec((None, None, D * ho * win, wo, win, C),
                         lambda b, g: (b, g, 0, 0, 0, 0)),
        ],
        # Same block index for every g -> the output slab stays resident in
        # VMEM across the G steps (accumulator pattern) and is flushed once,
        # so the torch.cat costs no extra HBM traffic.
        out_specs=pl.BlockSpec((None, (1 + G) * ho, win, wo, win, C),
                               lambda b, g: (b, 0, 0, 0, 0, 0)),
        scratch_shapes=[
            pltpu.VMEM((ho, 1, wo, 1, C), jnp.float32),   # sum_g pooled
            pltpu.VMEM((ho, 1, wo, 1, 1), jnp.float32),   # sum_g alpha
        ],
        compiler_params=pltpu.CompilerParams(
            dimension_semantics=("parallel", "arbitrary"),
            vmem_limit_bytes=vmem_limit),
    )(xr)

    return out.reshape(B, 1 + G, H, W, C)


# ----------------------------------------------------------------------------
# Pure-JAX reference (mirrors the PyTorch module op-for-op)
# ----------------------------------------------------------------------------

def pamd_reference(x, window=7):
    B, G, D, H, W, C = x.shape
    ho, wo = H // window, W // window
    x_cls = x[:, :, 0]                                      # (B, G, H, W, C)
    x_normal = jnp.mean(x[:, :, 1:], axis=2)                # (B, G, H, W, C)

    # AvgPool3d (1, 7, 7) on the class-token plane
    xc = x_cls.reshape(B, G, ho, window, wo, window, C).mean(axis=(3, 5))
    xf = jnp.transpose(xc.reshape(B, G, ho * wo, C), (0, 1, 3, 2))  # (B, G, C, S)

    norms = jnp.linalg.norm(xf, axis=2, keepdims=True)
    n = xf / norms
    dp = jnp.einsum('bgki,bgkj->bgij', n, n, precision=lax.Precision.HIGHEST)
    S = dp.shape[-1]
    dp = dp * (1.0 - jnp.eye(S, dtype=dp.dtype))[None, None]
    alpha = dp.sum(-1)                                      # (B, G, S)
    alpha_gs = alpha.sum(1)                                 # (B, S)
    wgt = jax.nn.softmax(alpha_gs, axis=-1)                 # (B, S)
    merged = (xf * wgt[:, None, None, :]).sum(axis=1)       # (B, C, S)
    merged = merged.reshape(B, C, ho, wo)
    up = jnp.repeat(jnp.repeat(merged, window, axis=2), window, axis=3)
    up = jnp.transpose(up, (0, 2, 3, 1))[:, None]           # (B, 1, H, W, C)
    return jnp.concatenate([up, x_normal], axis=1)          # (B, 1+G, H, W, C)


# ----------------------------------------------------------------------------
# Demo / self-check
# ----------------------------------------------------------------------------

if __name__ == "__main__":
    B, G, D, H, W, C = 2, 4, 5, 14, 14, 128   # window (1, 7, 7) -> 2x2 pooled map
    x = jax.random.normal(jax.random.PRNGKey(0), (B, G, D, H, W, C),
                          dtype=jnp.float32)

    fwd = jax.jit(pamd_forward)
    out = jax.block_until_ready(fwd(x))
    assert out.shape == (B, 1 + G, H, W, C), out.shape
    assert bool(jnp.all(jnp.isfinite(out)))

    ref = pamd_reference(x)
    err = float(jnp.max(jnp.abs(out - ref)))
    assert err < 2e-3, f"max abs error vs reference: {err}"

    print("KERNEL_OK")
</pallas_src>

<mosaic_0001>
module attributes {stable_mosaic.version = 11 : i64} {
  func.func @_pamd_fused_kernel(%arg0: i32, %arg1: i32, %arg2: memref<1x1x70x2x7x128xf32, #tpu.memory_space<vmem>>, %arg3: memref<1x10x7x2x7x128xf32, #tpu.memory_space<vmem>>, %arg4: memref<2x1x2x1x128xf32, #tpu.memory_space<vmem>>, %arg5: memref<2x1x2x1x1xf32, #tpu.memory_space<vmem>>) attributes {dimension_semantics = [#tpu.dimension_semantics<parallel>, #tpu.dimension_semantics<arbitrary>], iteration_bounds = array<i64: 2, 4>, scalar_prefetch = 0 : i64, scratch_operands = 2 : i64, tpu.core_type = #tpu.core_type<tc>, window_params = [{transform_indices = @transform_0, window_bounds = array<i64: 1, 1, 70, 2, 7, 128>}, {transform_indices = @transform_1, window_bounds = array<i64: 1, 10, 7, 2, 7, 128>}]} {
    %c0 = arith.constant 0 : index
    %c0_0 = arith.constant 0 : index
    %c0_1 = arith.constant 0 : index
    %c0_2 = arith.constant 0 : index
    %c0_3 = arith.constant 0 : index
    %c0_4 = arith.constant 0 : index
    %0 = vector.load %arg2[%c0, %c0_0, %c0_1, %c0_2, %c0_3, %c0_4] : memref<1x1x70x2x7x128xf32, #tpu.memory_space<vmem>>, vector<1x1x70x2x7x128xf32>
    %1 = vector.shape_cast %0 : vector<1x1x70x2x7x128xf32> to vector<70x2x7x128xf32>
    %2 = vector.shape_cast %1 : vector<70x2x7x128xf32> to vector<5x2x7x2x7x128xf32>
    %3 = vector.extract_strided_slice %2 {offsets = [1, 0, 0, 0, 0, 0], sizes = [4, 2, 7, 2, 7, 128], strides = [1, 1, 1, 1, 1, 1]} : vector<5x2x7x2x7x128xf32> to vector<4x2x7x2x7x128xf32>
    %cst = arith.constant dense<0.000000e+00> : vector<2x7x2x7x128xf32>
    %4 = vector.multi_reduction <add>, %3, %cst [0] : vector<4x2x7x2x7x128xf32> to vector<2x7x2x7x128xf32>
    %cst_5 = arith.constant 2.500000e-01 : f32
    %5 = vector.broadcast %cst_5 : f32 to vector<2x7x2x7x128xf32>
    %6 = arith.mulf %4, %5 : vector<2x7x2x7x128xf32>
    %c1_i32 = arith.constant 1 : i32
    %7 = arith.addi %arg1, %c1_i32 : i32
    %c2_i32 = arith.constant 2 : i32
    %8 = arith.muli %7, %c2_i32 : i32
    %9 = tpu.assume_multiple %8, 2 : i32
    %c0_6 = arith.constant 0 : index
    %10 = arith.index_cast %9 : i32 to index
    %c0_7 = arith.constant 0 : index
    %c0_8 = arith.constant 0 : index
    %c0_9 = arith.constant 0 : index
    %c0_10 = arith.constant 0 : index
    %11 = vector.load %arg3[%c0_6, %10, %c0_7, %c0_8, %c0_9, %c0_10] : memref<1x10x7x2x7x128xf32, #tpu.memory_space<vmem>>, vector<1x2x7x2x7x128xf32>
    %12 = vector.shape_cast %11 : vector<1x2x7x2x7x128xf32> to vector<2x7x2x7x128xf32>
    %13 = vector.shape_cast %6 : vector<2x7x2x7x128xf32> to vector<1x2x7x2x7x128xf32>
    tpu.vector_store %arg3[%c0_6, %10, %c0_7, %c0_8, %c0_9, %c0_10], %13 {strides = array<i32>} : memref<1x10x7x2x7x128xf32, #tpu.memory_space<vmem>>, vector<1x2x7x2x7x128xf32>,
    %14 = vector.extract_strided_slice %2 {offsets = [0, 0, 0, 0, 0, 0], sizes = [1, 2, 7, 2, 7, 128], strides = [1, 1, 1, 1, 1, 1]} : vector<5x2x7x2x7x128xf32> to vector<1x2x7x2x7x128xf32>
    %15 = vector.shape_cast %14 : vector<1x2x7x2x7x128xf32> to vector<2x7x2x7x128xf32>
    %cst_11 = arith.constant dense<0.000000e+00> : vector<2x7x2x128xf32>
    %16 = vector.multi_reduction <add>, %15, %cst_11 [3] : vector<2x7x2x7x128xf32> to vector<2x7x2x128xf32>
    %17 = vector.shape_cast %16 : vector<2x7x2x128xf32> to vector<2x7x2x1x128xf32>
    %cst_12 = arith.constant dense<0.000000e+00> : vector<2x2x1x128xf32>
    %18 = vector.multi_reduction <add>, %17, %cst_12 [1] : vector<2x7x2x1x128xf32> to vector<2x2x1x128xf32>
    %19 = vector.shape_cast %18 : vector<2x2x1x128xf32> to vector<2x1x2x1x128xf32>
    %cst_13 = arith.constant 0.0204081628 : f32
    %20 = vector.broadcast %cst_13 : f32 to vector<2x1x2x1x128xf32>
    %21 = arith.mulf %19, %20 : vector<2x1x2x1x128xf32>
    %22 = arith.mulf %21, %21 : vector<2x1x2x1x128xf32>
    %cst_14 = arith.constant dense<0.000000e+00> : vector<2x1x2x1xf32>
    %23 = vector.multi_reduction <add>, %22, %cst_14 [4] : vector<2x1x2x1x128xf32> to vector<2x1x2x1xf32>
    %24 = vector.shape_cast %23 : vector<2x1x2x1xf32> to vector<2x1x2x1x1xf32>
    %cst_15 = arith.constant 9.99999996E-13 : f32
    %25 = vector.broadcast %cst_15 : f32 to vector<2x1x2x1x1xf32>
    %26 = arith.addf %24, %25 : vector<2x1x2x1x1xf32>
    %27 = math.rsqrt %26 : vector<2x1x2x1x1xf32>
    %28 = vector.broadcast %27 : vector<2x1x2x1x1xf32> to vector<2x1x2x1x128xf32>
    %29 = arith.mulf %21, %28 : vector<2x1x2x1x128xf32>
    %cst_16 = arith.constant dense<0.000000e+00> : vector<2x1x1x128xf32>
    %30 = vector.multi_reduction <add>, %29, %cst_16 [2] : vector<2x1x2x1x128xf32> to vector<2x1x1x128xf32>
    %31 = vector.shape_cast %30 : vector<2x1x1x128xf32> to vector<2x1x1x1x128xf32>
    %cst_17 = arith.constant dense<0.000000e+00> : vector<1x1x1x128xf32>
    %32 = vector.multi_reduction <add>, %31, %cst_17 [0] : vector<2x1x1x1x128xf32> to vector<1x1x1x128xf32>
    %33 = vector.shape_cast %32 : vector<1x1x1x128xf32> to vector<1x1x1x1x128xf32>
    %34 = vector.broadcast %33 : vector<1x1x1x1x128xf32> to vector<2x1x2x1x128xf32>
    %35 = arith.subf %34, %29 : vector<2x1x2x1x128xf32>
    %36 = arith.mulf %29, %35 : vector<2x1x2x1x128xf32>
    %cst_18 = arith.constant dense<0.000000e+00> : vector<2x1x2x1xf32>
    %37 = vector.multi_reduction <add>, %36, %cst_18 [4] : vector<2x1x2x1x128xf32> to vector<2x1x2x1xf32>
    %38 = vector.shape_cast %37 : vector<2x1x2x1xf32> to vector<2x1x2x1x1xf32>
    %c0_i32 = arith.constant 0 : i32
    %39 = arith.cmpi eq, %arg1, %c0_i32 : i32
    %40 = arith.extui %39 : i1 to i32
    %c0_i32_19 = arith.constant 0 : i32
    %41 = arith.cmpi ne, %40, %c0_i32_19 : i32
    scf.if %41 {
      %cst_41 = arith.constant 0.000000e+00 : f32
      %51 = vector.broadcast %cst_41 : f32 to vector<2x1x2x1x128xf32>
      %c0_42 = arith.constant 0 : index
      %c0_43 = arith.constant 0 : index
      %c0_44 = arith.constant 0 : index
      %c0_45 = arith.constant 0 : index
      %c0_46 = arith.constant 0 : index
      %52 = vector.load %arg4[%c0_42, %c0_43, %c0_44, %c0_45, %c0_46] : memref<2x1x2x1x128xf32, #tpu.memory_space<vmem>>, vector<2x1x2x1x128xf32>
      tpu.vector_store %arg4[%c0_42, %c0_43, %c0_44, %c0_45, %c0_46], %51 {strides = array<i32>} : memref<2x1x2x1x128xf32, #tpu.memory_space<vmem>>, vector<2x1x2x1x128xf32>,
      %cst_47 = arith.constant 0.000000e+00 : f32
      %53 = vector.broadcast %cst_47 : f32 to vector<2x1x2x1x1xf32>
      %c0_48 = arith.constant 0 : index
      %c0_49 = arith.constant 0 : index
      %c0_50 = arith.constant 0 : index
      %c0_51 = arith.constant 0 : index
      %c0_52 = arith.constant 0 : index
      %54 = vector.load %arg5[%c0_48, %c0_49, %c0_50, %c0_51, %c0_52] : memref<2x1x2x1x1xf32, #tpu.memory_space<vmem>>, vector<2x1x2x1x1xf32>
      tpu.vector_store %arg5[%c0_48, %c0_49, %c0_50, %c0_51, %c0_52], %53 {strides = array<i32>} : memref<2x1x2x1x1xf32, #tpu.memory_space<vmem>>, vector<2x1x2x1x1xf32>,
    } else {
    }
    %c0_20 = arith.constant 0 : index
    %c0_21 = arith.constant 0 : index
    %c0_22 = arith.constant 0 : index
    %c0_23 = arith.constant 0 : index
    %c0_24 = arith.constant 0 : index
    %42 = vector.load %arg4[%c0_20, %c0_21, %c0_22, %c0_23, %c0_24] : memref<2x1x2x1x128xf32, #tpu.memory_space<vmem>>, vector<2x1x2x1x128xf32>
    %43 = arith.addf %42, %21 : vector<2x1x2x1x128xf32>
    %c0_25 = arith.constant 0 : index
    %c0_26 = arith.constant 0 : index
    %c0_27 = arith.constant 0 : index
    %c0_28 = arith.constant 0 : index
    %c0_29 = arith.constant 0 : index
    %44 = vector.load %arg4[%c0_25, %c0_26, %c0_27, %c0_28, %c0_29] : memref<2x1x2x1x128xf32, #tpu.memory_space<vmem>>, vector<2x1x2x1x128xf32>
    tpu.vector_store %arg4[%c0_25, %c0_26, %c0_27, %c0_28, %c0_29], %43 {strides = array<i32>} : memref<2x1x2x1x128xf32, #tpu.memory_space<vmem>>, vector<2x1x2x1x128xf32>,
    %c0_30 = arith.constant 0 : index
    %c0_31 = arith.constant 0 : index
    %c0_32 = arith.constant 0 : index
    %c0_33 = arith.constant 0 : index
    %c0_34 = arith.constant 0 : index
    %45 = vector.load %arg5[%c0_30, %c0_31, %c0_32, %c0_33, %c0_34] : memref<2x1x2x1x1xf32, #tpu.memory_space<vmem>>, vector<2x1x2x1x1xf32>
    %46 = arith.addf %45, %38 : vector<2x1x2x1x1xf32>
    %c0_35 = arith.constant 0 : index
    %c0_36 = arith.constant 0 : index
    %c0_37 = arith.constant 0 : index
    %c0_38 = arith.constant 0 : index
    %c0_39 = arith.constant 0 : index
    %47 = vector.load %arg5[%c0_35, %c0_36, %c0_37, %c0_38, %c0_39] : memref<2x1x2x1x1xf32, #tpu.memory_space<vmem>>, vector<2x1x2x1x1xf32>
    tpu.vector_store %arg5[%c0_35, %c0_36, %c0_37, %c0_38, %c0_39], %46 {strides = array<i32>} : memref<2x1x2x1x1xf32, #tpu.memory_space<vmem>>, vector<2x1x2x1x1xf32>,
    %c3_i32 = arith.constant 3 : i32
    %48 = arith.cmpi eq, %arg1, %c3_i32 : i32
    %49 = arith.extui %48 : i1 to i32
    %c0_i32_40 = arith.constant 0 : i32
    %50 = arith.cmpi ne, %49, %c0_i32_40 : i32
    scf.if %50 {
      %c0_41 = arith.constant 0 : index
      %c0_42 = arith.constant 0 : index
      %c0_43 = arith.constant 0 : index
      %c0_44 = arith.constant 0 : index
      %c0_45 = arith.constant 0 : index
      %51 = vector.load %arg5[%c0_41, %c0_42, %c0_43, %c0_44, %c0_45] : memref<2x1x2x1x1xf32, #tpu.memory_space<vmem>>, vector<2x1x2x1x1xf32>
      %cst_46 = arith.constant dense<0xFF800000> : vector<2x1x1x1xf32>
      %52 = vector.multi_reduction <maximumf>, %51, %cst_46 [2] : vector<2x1x2x1x1xf32> to vector<2x1x1x1xf32>
      %53 = vector.shape_cast %52 : vector<2x1x1x1xf32> to vector<2x1x1x1x1xf32>
      %cst_47 = arith.constant dense<0xFF800000> : vector<1x1x1x1xf32>
      %54 = vector.multi_reduction <maximumf>, %53, %cst_47 [0] : vector<2x1x1x1x1xf32> to vector<1x1x1x1xf32>
      %55 = vector.shape_cast %54 : vector<1x1x1x1xf32> to vector<1x1x1x1x1xf32>
      %56 = vector.broadcast %55 : vector<1x1x1x1x1xf32> to vector<2x1x2x1x1xf32>
      %57 = arith.subf %51, %56 : vector<2x1x2x1x1xf32>
      %58 = math.exp %57 : vector<2x1x2x1x1xf32>
      %cst_48 = arith.constant dense<0.000000e+00> : vector<2x1x1x1xf32>
      %59 = vector.multi_reduction <add>, %58, %cst_48 [2] : vector<2x1x2x1x1xf32> to vector<2x1x1x1xf32>
      %60 = vector.shape_cast %59 : vector<2x1x1x1xf32> to vector<2x1x1x1x1xf32>
      %cst_49 = arith.constant dense<0.000000e+00> : vector<1x1x1x1xf32>
      %61 = vector.multi_reduction <add>, %60, %cst_49 [0] : vector<2x1x1x1x1xf32> to vector<1x1x1x1xf32>
      %62 = vector.shape_cast %61 : vector<1x1x1x1xf32> to vector<1x1x1x1x1xf32>
      %63 = vector.broadcast %62 : vector<1x1x1x1x1xf32> to vector<2x1x2x1x1xf32>
      %64 = arith.divf %58, %63 : vector<2x1x2x1x1xf32>
      %c0_50 = arith.constant 0 : index
      %c0_51 = arith.constant 0 : index
      %c0_52 = arith.constant 0 : index
      %c0_53 = arith.constant 0 : index
      %c0_54 = arith.constant 0 : index
      %65 = vector.load %arg4[%c0_50, %c0_51, %c0_52, %c0_53, %c0_54] : memref<2x1x2x1x128xf32, #tpu.memory_space<vmem>>, vector<2x1x2x1x128xf32>
      %66 = vector.broadcast %64 : vector<2x1x2x1x1xf32> to vector<2x1x2x1x128xf32>
      %67 = arith.mulf %65, %66 : vector<2x1x2x1x128xf32>
      %68 = vector.shape_cast %67 : vector<2x1x2x1x128xf32> to vector<2x1x2x1x128xf32>
      %69 = vector.broadcast %68 : vector<2x1x2x1x128xf32> to vector<2x7x2x7x128xf32>
      %c0_55 = arith.constant 0 : index
      %c0_56 = arith.constant 0 : index
      %c0_57 = arith.constant 0 : index
      %c0_58 = arith.constant 0 : index
      %c0_59 = arith.constant 0 : index
      %c0_60 = arith.constant 0 : index
      %70 = vector.load %arg3[%c0_55, %c0_56, %c0_57, %c0_58, %c0_59, %c0_60] : memref<1x10x7x2x7x128xf32, #tpu.memory_space<vmem>>, vector<1x2x7x2x7x128xf32>
      %71 = vector.shape_cast %70 : vector<1x2x7x2x7x128xf32> to vector<2x7x2x7x128xf32>
      %72 = vector.shape_cast %69 : vector<2x7x2x7x128xf32> to vector<1x2x7x2x7x128xf32>
      tpu.vector_store %arg3[%c0_55, %c0_56, %c0_57, %c0_58, %c0_59, %c0_60], %72 {strides = array<i32>} : memref<1x10x7x2x7x128xf32, #tpu.memory_space<vmem>>, vector<1x2x7x2x7x128xf32>,
    } else {
    }
    return
  }
  func.func @transform_0(%arg0: i32, %arg1: i32) -> (i32, i32, i32, i32, i32, i32) {
    %c0_i32 = arith.constant 0 : i32
    %c0_i32_0 = arith.constant 0 : i32
    %c0_i32_1 = arith.constant 0 : i32
    %c0_i32_2 = arith.constant 0 : i32
    %c0_i32_3 = arith.constant 0 : i32
    return %arg0, %arg1, %c0_i32, %c0_i32_0, %c0_i32_1, %c0_i32_2 : i32, i32, i32, i32, i32, i32
  }
  func.func @transform_1(%arg0: i32, %arg1: i32) -> (i32, i32, i32, i32, i32, i32) {
    %c0_i32 = arith.constant 0 : i32
    %c0_i32_0 = arith.constant 0 : i32
    %c0_i32_1 = arith.constant 0 : i32
    %c0_i32_2 = arith.constant 0 : i32
    %c0_i32_3 = arith.constant 0 : i32
    %c0_i32_4 = arith.constant 0 : i32
    return %arg0, %c0_i32, %c0_i32_0, %c0_i32_1, %c0_i32_2, %c0_i32_3 : i32, i32, i32, i32, i32, i32
  }
}

</mosaic_0001>

<llo_original>
// kernel: pamd_forward.1
$region0: #{pamd_forward.1}
  #allocation0 [shape = 'u32[]', space=smem, size = 0x4, offset = 0x4, fixed_abs, tag = 'smem constant byte address 0x4 - core index']
  #allocation1 [shape = 'u32[72,128]{1,0:T(1,128)}', space=vmem, size = 0x9000, scoped, tag = 'internal scratch']
  #allocation2 [shape = 'f32[2,1,2,1,128]{4,3,2,1,0:T(1,128)}', space=vmem, size = 0x800, scoped, tag = 'scratch operand']
  #allocation3 [shape = 'f32[2,1,2,1,1]{4,3,2,1,0:T(1,128)}', space=vmem, size = 0x800, scoped, tag = 'scratch operand']
  %s0 = inlined_call_operand.vmem [shape: f32[2,4,70,2,7,128], index: 0, kind: input, shape index: {}]
  %s1 = inlined_call_operand.vmem [shape: f32[2,10,7,2,7,128], index: 1, kind: output, shape index: {}]
  %s2 = sld [smem:[#allocation0]]
  $region45: #{pamd_forward.1} parent=0
    _
  %s4 = ssub.s32 1, %s2
  %s5 = scalar_select 0, %s4, %s2
  loop: start=0, step=1, limit=10
  $region2: #{pamd_forward.1} parent=0 // loop_pre_header
    _
  $region3: #{pamd_forward.1} parent=0 // loop_header
    %s7 = sphi 0, %s11
    %p8 = scmp.ge.s32.totalorder %s7, 10
    %s14 = sphi 0, %s26
    %s15 = sphi 0, %s22
    %s16 = sphi 0, %s14
    %s17 = sphi 0, %s15
    %s18 = sphi 0, %s16
    %s19 = sphi 0, %s17
    %s31 = sphi 0, %s33
    %s34 = sphi 0, %s31
    %s35 = sphi 0, %s34
    %s51 = sphi 0, %s35
    %s57 = sphi 0, %s59
    %s60 = sphi 0, %s57
    %s61 = sphi 0, %s60
    %s77 = sphi 0, %s61
  $region4: #{pamd_forward.1} parent=0 // loop_header_branch
    %10 = sbr.rel (%p8) target = $region8
  $region5: #{pamd_forward.1} parent=0 // loop_body
    %s12 = ssub.s32 %s7, 1
    %s13 = ssub.s32 %s7, 2
    %s20 = sadd.s32 1, %s15
    %p21 = scmp.ge.s32.totalorder %s20, 4
    %s22 = scalar_select %p21, 0, %s20
    %s23 = sadd.s32 1, %s14
    %s24 = scalar_select %p21, %s23, %s14
    %p25 = scmp.ge.s32.totalorder %s24, 2
    %s26 = scalar_select %p25, 0, %s24
    %s27 = ssub.s32 %s14, %s26
    %s28 = ssub.s32 %s15, %s22
    %s29 = sor.u32 %s27, %s28
    %p30 = scmp.eq.s32.totalorder %s29, 0
    %s32 = sadd.s32 %s31, 1
    %s33 = scalar_select %p30, %s31, %s32
    %p36 = pneg %p30
    %p37 = scmp.eq.s32.totalorder %s7, 7
    %p38 = por %p36, %p37
    %p39 = scmp.ne.s32.totalorder %s31, %s34
    %p40 = scmp.eq.s32.totalorder %s7, 0
    %p41 = por %p39, %p40
    %p42 = scmp.ne.s32.totalorder %s31, %s34
    %p43 = scmp.eq.s32.totalorder %s12, 7
    %p44 = por %p42, %p43
    %p45 = scmp.ne.s32.totalorder %s34, %s35
    %p46 = scmp.eq.s32.totalorder %s12, 0
    %p47 = por %p45, %p46
    %p48 = scmp.ne.s32.totalorder %s34, %s35
    %p49 = scmp.eq.s32.totalorder %s13, 7
    %p50 = por %p48, %p49
    %p52 = scmp.ne.s32.totalorder %s35, %s51
    %p53 = scmp.eq.s32.totalorder %s13, 0
    %p54 = por %p52, %p53
    %s55 = ssub.s32 %s14, %s26
    %p56 = scmp.eq.s32.totalorder %s55, 0
    %s58 = sadd.s32 %s57, 1
    %s59 = scalar_select %p56, %s57, %s58
    %p62 = pneg %p56
    %p63 = scmp.eq.s32.totalorder %s7, 7
    %p64 = por %p62, %p63
    %p65 = scmp.ne.s32.totalorder %s57, %s60
    %p66 = scmp.eq.s32.totalorder %s7, 0
    %p67 = por %p65, %p66
    %p68 = scmp.ne.s32.totalorder %s57, %s60
    %p69 = scmp.eq.s32.totalorder %s12, 7
    %p70 = por %p68, %p69
    %p71 = scmp.ne.s32.totalorder %s60, %s61
    %p72 = scmp.eq.s32.totalorder %s12, 0
    %p73 = por %p71, %p72
    %p74 = scmp.ne.s32.totalorder %s60, %s61
    %p75 = scmp.eq.s32.totalorder %s13, 7
    %p76 = por %p74, %p75
    %p78 = scmp.ne.s32.totalorder %s61, %s77
    %p79 = scmp.eq.s32.totalorder %s13, 0
    %p80 = por %p78, %p79
    %p81 = scmp.le.s32.totalorder 1, %s7
    %p82 = scmp.lt.s32.totalorder %s7, 9
    %p83 = pnand %p81, %p82
    %p84 = pneg %p83
    // Predicated region
    $region9: #{pamd_forward.1} parent=5 // pred_check
      _
    $region10: #{pamd_forward.1} parent=5 // pred_check_branch
      %86 = sbr.rel (%p83) target = $region12
    $region11: #{pamd_forward.1} parent=5 // pred_region
      %s87 = ssub.s32 %s7, 1
    $region12: #{pamd_forward.1} parent=5 // pred_fallthru
      _
    %p88 = scmp.lt.s32.totalorder %s7, 8
    // Predicated region
    $region13: #{pamd_forward.1} parent=5 // pred_check
      %p89 = pneg %p88
    $region14: #{pamd_forward.1} parent=5 // pred_check_branch
      %91 = sbr.rel (%p89) target = $region16
    $region15: #{pamd_forward.1} parent=5 // pred_region
      // Predicated region
      $region17: #{pamd_forward.1} parent=15 // pred_check
        %p92 = pneg %p41
      $region18: #{pamd_forward.1} parent=15 // pred_check_branch
        %94 = sbr.rel (%p92) target = $region20
      $region19: #{pamd_forward.1} parent=15 // pred_region
        %p95 = scmp.lt.s32.totalorder %s14, 1
        %s96 = scalar_select %p95, %s14, 1
        %p97 = scmp.lt.s32.totalorder %s15, 3
        %s98 = scalar_select %p97, %s15, 3
        %s99 = smul.addr %s98, 140
        %s100 = smul.addr %s96, 560
        %s101 = sadd.s32 %s99, %s100
        %s102 = smul.addr %s101, 8
        %s103 = scalar_lea.vmem %s0, %s102
      $region20: #{pamd_forward.1} parent=15 // pred_fallthru
        _
    $region16: #{pamd_forward.1} parent=5 // pred_fallthru
      _
    %p104 = scmp.le.s32.totalorder 1, %s7
    %p105 = scmp.lt.s32.totalorder %s7, 9
    %p106 = pnand %p104, %p105
    %p107 = pneg %p106
    // Predicated region
    $region21: #{pamd_forward.1} parent=5 // pred_check
      _
    $region22: #{pamd_forward.1} parent=5 // pred_check_branch
      %109 = sbr.rel (%p106) target = $region24
    $region23: #{pamd_forward.1} parent=5 // pred_region
      %s110 = ssub.s32 %s7, 1
      %p111 = scmp.lt.s32.totalorder %s16, 1
      %s112 = scalar_select %p111, %s16, 1
      %p113 = scmp.lt.s32.totalorder %s17, 3
      %s114 = scalar_select %p113, %s17, 3
      %s115 = smul.addr %s114, 140
      %s116 = smul.addr %s112, 560
      %s117 = sadd.s32 %s115, %s116
      %s118 = smul.addr %s117, 8
      %s119 = scalar_lea.vmem %s0, %s118
      %p120 = pneg %p47
      %p121 = pneg %p44
      %p122 = pneg %p73
      %p123 = pneg %p70
      %p124 = scmp.lt.s32.totalorder %s16, 1
      %s125 = scalar_select %p124, %s16, 1
      %s126 = smul.addr %s125, 140
      %s127 = smul.addr %s126, 8
      %s128 = scalar_lea.vmem %s1, %s127
      %p129 = scmp.lt.s32.totalorder %s16, 1
      %s130 = scalar_select %p129, %s16, 1
      %p131 = scmp.lt.s32.totalorder %s17, 3
      %s132 = scalar_select %p131, %s17, 3
      %s133 = smul.addr %s132, 140
      %s134 = smul.addr %s130, 560
      %s135 = sadd.s32 %s133, %s134
      %s136 = smul.addr %s135, 8
      %s137 = scalar_lea.vmem %s0, %s136
      %p138 = scmp.lt.s32.totalorder %s16, 1
      %s139 = scalar_select %p138, %s16, 1
      %s140 = smul.addr %s139, 140
      %s141 = smul.addr %s140, 8
      %s142 = scalar_lea.vmem %s1, %s141
      %v143 = vld [vmem:[%s137] sm:$0x7f]
      %v144 = vld [vmem:[%s137 + $0x8] sm:$0x7f]
      %v145 = vld [vmem:[%s137 + $0x10] sm:$0x7f]
      %v146 = vld [vmem:[%s137 + $0x18] sm:$0x7f]
      %v147 = vld [vmem:[%s137 + $0x20] sm:$0x7f]
      %v148 = vld [vmem:[%s137 + $0x28] sm:$0x7f]
      %v149 = vld [vmem:[%s137 + $0x30] sm:$0x7f]
      %v150 = vld [vmem:[%s137 + $0x38] sm:$0x7f]
      %v151 = vld [vmem:[%s137 + $0x40] sm:$0x7f]
      %v152 = vld [vmem:[%s137 + $0x48] sm:$0x7f]
      %v153 = vld [vmem:[%s137 + $0x50] sm:$0x7f]
      %v154 = vld [vmem:[%s137 + $0x58] sm:$0x7f]
      %v155 = vld [vmem:[%s137 + $0x60] sm:$0x7f]
      %v156 = vld [vmem:[%s137 + $0x68] sm:$0x7f]
      %v157 = vld [vmem:[%s137 + $0x70] sm:$0x7f]
      %v158 = vld [vmem:[%s137 + $0x78] sm:$0x7f]
      %v159 = vld [vmem:[%s137 + $0x80] sm:$0x7f]
      %v160 = vld [vmem:[%s137 + $0x88] sm:$0x7f]
      %v161 = vld [vmem:[%s137 + $0x90] sm:$0x7f]
      %v162 = vld [vmem:[%s137 + $0x98] sm:$0x7f]
      %v163 = vld [vmem:[%s137 + $0xa0] sm:$0x7f]
      %v164 = vld [vmem:[%s137 + $0xa8] sm:$0x7f]
      %v165 = vld [vmem:[%s137 + $0xb0] sm:$0x7f]
      %v166 = vld [vmem:[%s137 + $0xb8] sm:$0x7f]
      %v167 = vld [vmem:[%s137 + $0xc0] sm:$0x7f]
      %v168 = vld [vmem:[%s137 + $0xc8] sm:$0x7f]
      %v169 = vld [vmem:[%s137 + $0xd0] sm:$0x7f]
      %v170 = vld [vmem:[%s137 + $0xd8] sm:$0x7f]
      %v171 = vld [vmem:[%s137 + $0xe0] sm:$0x7f]
      %v172 = vld [vmem:[%s137 + $0xe8] sm:$0x7f]
      %v173 = vld [vmem:[%s137 + $0xf0] sm:$0x7f]
      %v174 = vld [vmem:[%s137 + $0xf8] sm:$0x7f]
      %v175 = vld [vmem:[%s137 + $0x100] sm:$0x7f]
      %v176 = vld [vmem:[%s137 + $0x108] sm:$0x7f]
      %v177 = vld [vmem:[%s137 + $0x110] sm:$0x7f]
      %v178 = vld [vmem:[%s137 + $0x118] sm:$0x7f]
      %v179 = vld [vmem:[%s137 + $0x120] sm:$0x7f]
      %v180 = vld [vmem:[%s137 + $0x128] sm:$0x7f]
      %v181 = vld [vmem:[%s137 + $0x130] sm:$0x7f]
      %v182 = vld [vmem:[%s137 + $0x138] sm:$0x7f]
      %v183 = vld [vmem:[%s137 + $0x140] sm:$0x7f]
      %v184 = vld [vmem:[%s137 + $0x148] sm:$0x7f]
      %v185 = vld [vmem:[%s137 + $0x150] sm:$0x7f]
      %v186 = vld [vmem:[%s137 + $0x158] sm:$0x7f]
      %v187 = vld [vmem:[%s137 + $0x160] sm:$0x7f]
      %v188 = vld [vmem:[%s137 + $0x168] sm:$0x7f]
      %v189 = vld [vmem:[%s137 + $0x170] sm:$0x7f]
      %v190 = vld [vmem:[%s137 + $0x178] sm:$0x7f]
      %v191 = vld [vmem:[%s137 + $0x180] sm:$0x7f]
      %v192 = vld [vmem:[%s137 + $0x188] sm:$0x7f]
      %v193 = vld [vmem:[%s137 + $0x190] sm:$0x7f]
      %v194 = vld [vmem:[%s137 + $0x198] sm:$0x7f]
      %v195 = vld [vmem:[%s137 + $0x1a0] sm:$0x7f]
      %v196 = vld [vmem:[%s137 + $0x1a8] sm:$0x7f]
      %v197 = vld [vmem:[%s137 + $0x1b0] sm:$0x7f]
      %v198 = vld [vmem:[%s137 + $0x1b8] sm:$0x7f]
      %v199 = vld [vmem:[%s137 + $0x1c0] sm:$0x7f]
      %v200 = vld [vmem:[%s137 + $0x1c8] sm:$0x7f]
      %v201 = vld [vmem:[%s137 + $0x1d0] sm:$0x7f]
      %v202 = vld [vmem:[%s137 + $0x1d8] sm:$0x7f]
      %v203 = vld [vmem:[%s137 + $0x1e0] sm:$0x7f]
      %v204 = vld [vmem:[%s137 + $0x1e8] sm:$0x7f]
      %v205 = vld [vmem:[%s137 + $0x1f0] sm:$0x7f]
      %v206 = vld [vmem:[%s137 + $0x1f8] sm:$0x7f]
      %v207 = vld [vmem:[%s137 + $0x200] sm:$0x7f]
      %v208 = vld [vmem:[%s137 + $0x208] sm:$0x7f]
      %v209 = vld [vmem:[%s137 + $0x210] sm:$0x7f]
      %v210 = vld [vmem:[%s137 + $0x218] sm:$0x7f]
      %v211 = vld [vmem:[%s137 + $0x220] sm:$0x7f]
      %v212 = vld [vmem:[%s137 + $0x228] sm:$0x7f]
      %v213 = vld [vmem:[%s137 + $0x230] sm:$0x7f]
      %v214 = vld [vmem:[%s137 + $0x238] sm:$0x7f]
      %v215 = vld [vmem:[%s137 + $0x240] sm:$0x7f]
      %v216 = vld [vmem:[%s137 + $0x248] sm:$0x7f]
      %v217 = vld [vmem:[%s137 + $0x250] sm:$0x7f]
      %v218 = vld [vmem:[%s137 + $0x258] sm:$0x7f]
      %v219 = vld [vmem:[%s137 + $0x260] sm:$0x7f]
      %v220 = vld [vmem:[%s137 + $0x268] sm:$0x7f]
      %v221 = vld [vmem:[%s137 + $0x270] sm:$0x7f]
      %v222 = vld [vmem:[%s137 + $0x278] sm:$0x7f]
      %v223 = vld [vmem:[%s137 + $0x280] sm:$0x7f]
      %v224 = vld [vmem:[%s137 + $0x288] sm:$0x7f]
      %v225 = vld [vmem:[%s137 + $0x290] sm:$0x7f]
      %v226 = vld [vmem:[%s137 + $0x298] sm:$0x7f]
      %v227 = vld [vmem:[%s137 + $0x2a0] sm:$0x7f]
      %v228 = vld [vmem:[%s137 + $0x2a8] sm:$0x7f]
      %v229 = vld [vmem:[%s137 + $0x2b0] sm:$0x7f]
      %v230 = vld [vmem:[%s137 + $0x2b8] sm:$0x7f]
      %v231 = vld [vmem:[%s137 + $0x2c0] sm:$0x7f]
      %v232 = vld [vmem:[%s137 + $0x2c8] sm:$0x7f]
      %v233 = vld [vmem:[%s137 + $0x2d0] sm:$0x7f]
      %v234 = vld [vmem:[%s137 + $0x2d8] sm:$0x7f]
      %v235 = vld [vmem:[%s137 + $0x2e0] sm:$0x7f]
      %v236 = vld [vmem:[%s137 + $0x2e8] sm:$0x7f]
      %v237 = vld [vmem:[%s137 + $0x2f0] sm:$0x7f]
      %v238 = vld [vmem:[%s137 + $0x2f8] sm:$0x7f]
      %v239 = vld [vmem:[%s137 + $0x300] sm:$0x7f]
      %v240 = vld [vmem:[%s137 + $0x308] sm:$0x7f]
      %v241 = vld [vmem:[%s137 + $0x310] sm:$0x7f]
      %v242 = vld [vmem:[%s137 + $0x318] sm:$0x7f]
      %v243 = vld [vmem:[%s137 + $0x320] sm:$0x7f]
      %v244 = vld [vmem:[%s137 + $0x328] sm:$0x7f]
      %v245 = vld [vmem:[%s137 + $0x330] sm:$0x7f]
      %v246 = vld [vmem:[%s137 + $0x338] sm:$0x7f]
      %v247 = vld [vmem:[%s137 + $0x340] sm:$0x7f]
      %v248 = vld [vmem:[%s137 + $0x348] sm:$0x7f]
      %v249 = vld [vmem:[%s137 + $0x350] sm:$0x7f]
      %v250 = vld [vmem:[%s137 + $0x358] sm:$0x7f]
      %v251 = vld [vmem:[%s137 + $0x360] sm:$0x7f]
      %v252 = vld [vmem:[%s137 + $0x368] sm:$0x7f]
      %v253 = vld [vmem:[%s137 + $0x370] sm:$0x7f]
      %v254 = vld [vmem:[%s137 + $0x378] sm:$0x7f]
      %v255 = vld [vmem:[%s137 + $0x380] sm:$0x7f]
      %v256 = vld [vmem:[%s137 + $0x388] sm:$0x7f]
      %v257 = vld [vmem:[%s137 + $0x390] sm:$0x7f]
      %v258 = vld [vmem:[%s137 + $0x398] sm:$0x7f]
      %v259 = vld [vmem:[%s137 + $0x3a0] sm:$0x7f]
      %v260 = vld [vmem:[%s137 + $0x3a8] sm:$0x7f]
      %v261 = vld [vmem:[%s137 + $0x3b0] sm:$0x7f]
      %v262 = vld [vmem:[%s137 + $0x3b8] sm:$0x7f]
      %v263 = vld [vmem:[%s137 + $0x3c0] sm:$0x7f]
      %v264 = vld [vmem:[%s137 + $0x3c8] sm:$0x7f]
      %v265 = vld [vmem:[%s137 + $0x3d0] sm:$0x7f]
      %v266 = vld [vmem:[%s137 + $0x3d8] sm:$0x7f]
      %v267 = vld [vmem:[%s137 + $0x3e0] sm:$0x7f]
      %v268 = vld [vmem:[%s137 + $0x3e8] sm:$0x7f]
      %v269 = vld [vmem:[%s137 + $0x3f0] sm:$0x7f]
      %v270 = vld [vmem:[%s137 + $0x3f8] sm:$0x7f]
      %v271 = vld [vmem:[%s137 + $0x400] sm:$0x7f]
      %v272 = vld [vmem:[%s137 + $0x408] sm:$0x7f]
      %v273 = vld [vmem:[%s137 + $0x410] sm:$0x7f]
      %v274 = vld [vmem:[%s137 + $0x418] sm:$0x7f]
      %v275 = vld [vmem:[%s137 + $0x420] sm:$0x7f]
      %v276 = vld [vmem:[%s137 + $0x428] sm:$0x7f]
      %v277 = vld [vmem:[%s137 + $0x430] sm:$0x7f]
      %v278 = vld [vmem:[%s137 + $0x438] sm:$0x7f]
      %v279 = vld [vmem:[%s137 + $0x440] sm:$0x7f]
      %v280 = vld [vmem:[%s137 + $0x448] sm:$0x7f]
      %v281 = vld [vmem:[%s137 + $0x450] sm:$0x7f]
      %v282 = vld [vmem:[%s137 + $0x458] sm:$0x7f]
      %vm283 = vcmask 1046528
      %v284 = vsel %vm283, %v171, 0.0
      %v285 = vsel %vm283, %v199, 0.0
      %v286 = vadd.f32 %v284, %v285
      %v287 = vsel %vm283, %v227, 0.0
      %v288 = vadd.f32 %v286, %v287
      %v289 = vsel %vm283, %v255, 0.0
      %v290 = vadd.f32 %v288, %v289
      %v291 = vsel %vm283, %v172, 0.0
      %v292 = vsel %vm283, %v200, 0.0
      %v293 = vadd.f32 %v291, %v292
      %v294 = vsel %vm283, %v228, 0.0
      %v295 = vadd.f32 %v293, %v294
      %v296 = vsel %vm283, %v256, 0.0
      %v297 = vadd.f32 %v295, %v296
      %v298 = vsel %vm283, %v173, 0.0
      %v299 = vsel %vm283, %v201, 0.0
      %v300 = vadd.f32 %v298, %v299
      %v301 = vsel %vm283, %v229, 0.0
      %v302 = vadd.f32 %v300, %v301
      %v303 = vsel %vm283, %v257, 0.0
      %v304 = vadd.f32 %v302, %v303
      %v305 = vsel %vm283, %v174, 0.0
      %v306 = vsel %vm283, %v202, 0.0
      %v307 = vadd.f32 %v305, %v306
      %v308 = vsel %vm283, %v230, 0.0
      %v309 = vadd.f32 %v307, %v308
      %v310 = vsel %vm283, %v258, 0.0
      %v311 = vadd.f32 %v309, %v310
      %v312 = vsel %vm283, %v175, 0.0
      %v313 = vsel %vm283, %v203, 0.0
      %v314 = vadd.f32 %v312, %v313
      %v315 = vsel %vm283, %v231, 0.0
      %v316 = vadd.f32 %v314, %v315
      %v317 = vsel %vm283, %v259, 0.0
      %v318 = vadd.f32 %v316, %v317
      %v319 = vsel %vm283, %v176, 0.0
      %v320 = vsel %vm283, %v204, 0.0
      %v321 = vadd.f32 %v319, %v320
      %v322 = vsel %vm283, %v232, 0.0
      %v323 = vadd.f32 %v321, %v322
      %v324 = vsel %vm283, %v260, 0.0
      %v325 = vadd.f32 %v323, %v324
      %v326 = vsel %vm283, %v177, 0.0
      %v327 = vsel %vm283, %v205, 0.0
      %v328 = vadd.f32 %v326, %v327
      %v329 = vsel %vm283, %v233, 0.0
      %v330 = vadd.f32 %v328, %v329
      %v331 = vsel %vm283, %v261, 0.0
      %v332 = vadd.f32 %v330, %v331
      %v333 = vsel %vm283, %v178, 0.0
      %v334 = vsel %vm283, %v206, 0.0
      %v335 = vadd.f32 %v333, %v334
      %v336 = vsel %vm283, %v234, 0.0
      %v337 = vadd.f32 %v335, %v336
      %v338 = vsel %vm283, %v262, 0.0
      %v339 = vadd.f32 %v337, %v338
      %v340 = vsel %vm283, %v179, 0.0
      %v341 = vsel %vm283, %v207, 0.0
      %v342 = vadd.f32 %v340, %v341
      %v343 = vsel %vm283, %v235, 0.0
      %v344 = vadd.f32 %v342, %v343
      %v345 = vsel %vm283, %v263, 0.0
      %v346 = vadd.f32 %v344, %v345
      %v347 = vsel %vm283, %v180, 0.0
      %v348 = vsel %vm283, %v208, 0.0
      %v349 = vadd.f32 %v347, %v348
      %v350 = vsel %vm283, %v236, 0.0
      %v351 = vadd.f32 %v349, %v350
      %v352 = vsel %vm283, %v264, 0.0
      %v353 = vadd.f32 %v351, %v352
      %v354 = vsel %vm283, %v181, 0.0
      %v355 = vsel %vm283, %v209, 0.0
      %v356 = vadd.f32 %v354, %v355
      %v357 = vsel %vm283, %v237, 0.0
      %v358 = vadd.f32 %v356, %v357
      %v359 = vsel %vm283, %v265, 0.0
      %v360 = vadd.f32 %v358, %v359
      %v361 = vsel %vm283, %v182, 0.0
      %v362 = vsel %vm283, %v210, 0.0
      %v363 = vadd.f32 %v361, %v362
      %v364 = vsel %vm283, %v238, 0.0
      %v365 = vadd.f32 %v363, %v364
      %v366 = vsel %vm283, %v266, 0.0
      %v367 = vadd.f32 %v365, %v366
      %v368 = vsel %vm283, %v183, 0.0
      %v369 = vsel %vm283, %v211, 0.0
      %v370 = vadd.f32 %v368, %v369
      %v371 = vsel %vm283, %v239, 0.0
      %v372 = vadd.f32 %v370, %v371
      %v373 = vsel %vm283, %v267, 0.0
      %v374 = vadd.f32 %v372, %v373
      %v375 = vsel %vm283, %v184, 0.0
      %v376 = vsel %vm283, %v212, 0.0
      %v377 = vadd.f32 %v375, %v376
      %v378 = vsel %vm283, %v240, 0.0
      %v379 = vadd.f32 %v377, %v378
      %v380 = vsel %vm283, %v268, 0.0
      %v381 = vadd.f32 %v379, %v380
      %v382 = vsel %vm283, %v185, 0.0
      %v383 = vsel %vm283, %v213, 0.0
      %v384 = vadd.f32 %v382, %v383
      %v385 = vsel %vm283, %v241, 0.0
      %v386 = vadd.f32 %v384, %v385
      %v387 = vsel %vm283, %v269, 0.0
      %v388 = vadd.f32 %v386, %v387
      %v389 = vsel %vm283, %v186, 0.0
      %v390 = vsel %vm283, %v214, 0.0
      %v391 = vadd.f32 %v389, %v390
      %v392 = vsel %vm283, %v242, 0.0
      %v393 = vadd.f32 %v391, %v392
      %v394 = vsel %vm283, %v270, 0.0
      %v395 = vadd.f32 %v393, %v394
      %v396 = vsel %vm283, %v187, 0.0
      %v397 = vsel %vm283, %v215, 0.0
      %v398 = vadd.f32 %v396, %v397
      %v399 = vsel %vm283, %v243, 0.0
      %v400 = vadd.f32 %v398, %v399
      %v401 = vsel %vm283, %v271, 0.0
      %v402 = vadd.f32 %v400, %v401
      %v403 = vsel %vm283, %v188, 0.0
      %v404 = vsel %vm283, %v216, 0.0
      %v405 = vadd.f32 %v403, %v404
      %v406 = vsel %vm283, %v244, 0.0
      %v407 = vadd.f32 %v405, %v406
      %v408 = vsel %vm283, %v272, 0.0
      %v409 = vadd.f32 %v407, %v408
      %v410 = vsel %vm283, %v189, 0.0
      %v411 = vsel %vm283, %v217, 0.0
      %v412 = vadd.f32 %v410, %v411
      %v413 = vsel %vm283, %v245, 0.0
      %v414 = vadd.f32 %v412, %v413
      %v415 = vsel %vm283, %v273, 0.0
      %v416 = vadd.f32 %v414, %v415
      %v417 = vsel %vm283, %v190, 0.0
      %v418 = vsel %vm283, %v218, 0.0
      %v419 = vadd.f32 %v417, %v418
      %v420 = vsel %vm283, %v246, 0.0
      %v421 = vadd.f32 %v419, %v420
      %v422 = vsel %vm283, %v274, 0.0
      %v423 = vadd.f32 %v421, %v422
      %v424 = vsel %vm283, %v191, 0.0
      %v425 = vsel %vm283, %v219, 0.0
      %v426 = vadd.f32 %v424, %v425
      %v427 = vsel %vm283, %v247, 0.0
      %v428 = vadd.f32 %v426, %v427
      %v429 = vsel %vm283, %v275, 0.0
      %v430 = vadd.f32 %v428, %v429
      %v431 = vsel %vm283, %v192, 0.0
      %v432 = vsel %vm283, %v220, 0.0
      %v433 = vadd.f32 %v431, %v432
      %v434 = vsel %vm283, %v248, 0.0
      %v435 = vadd.f32 %v433, %v434
      %v436 = vsel %vm283, %v276, 0.0
      %v437 = vadd.f32 %v435, %v436
      %v438 = vsel %vm283, %v193, 0.0
      %v439 = vsel %vm283, %v221, 0.0
      %v440 = vadd.f32 %v438, %v439
      %v441 = vsel %vm283, %v249, 0.0
      %v442 = vadd.f32 %v440, %v441
      %v443 = vsel %vm283, %v277, 0.0
      %v444 = vadd.f32 %v442, %v443
      %v445 = vsel %vm283, %v194, 0.0
      %v446 = vsel %vm283, %v222, 0.0
      %v447 = vadd.f32 %v445, %v446
      %v448 = vsel %vm283, %v250, 0.0
      %v449 = vadd.f32 %v447, %v448
      %v450 = vsel %vm283, %v278, 0.0
      %v451 = vadd.f32 %v449, %v450
      %v452 = vsel %vm283, %v195, 0.0
      %v453 = vsel %vm283, %v223, 0.0
      %v454 = vadd.f32 %v452, %v453
      %v455 = vsel %vm283, %v251, 0.0
      %v456 = vadd.f32 %v454, %v455
      %v457 = vsel %vm283, %v279, 0.0
      %v458 = vadd.f32 %v456, %v457
      %v459 = vsel %vm283, %v196, 0.0
      %v460 = vsel %vm283, %v224, 0.0
      %v461 = vadd.f32 %v459, %v460
      %v462 = vsel %vm283, %v252, 0.0
      %v463 = vadd.f32 %v461, %v462
      %v464 = vsel %vm283, %v280, 0.0
      %v465 = vadd.f32 %v463, %v464
      %v466 = vsel %vm283, %v197, 0.0
      %v467 = vsel %vm283, %v225, 0.0
      %v468 = vadd.f32 %v466, %v467
      %v469 = vsel %vm283, %v253, 0.0
      %v470 = vadd.f32 %v468, %v469
      %v471 = vsel %vm283, %v281, 0.0
      %v472 = vadd.f32 %v470, %v471
      %v473 = vsel %vm283, %v198, 0.0
      %v474 = vsel %vm283, %v226, 0.0
      %v475 = vadd.f32 %v473, %v474
      %v476 = vsel %vm283, %v254, 0.0
      %v477 = vadd.f32 %v475, %v476
      %v478 = vsel %vm283, %v282, 0.0
      %v479 = vadd.f32 %v477, %v478
      %v480 = vmul.f32 %v290, 0.25
      %v481 = vmul.f32 %v297, 0.25
      %v482 = vmul.f32 %v304, 0.25
      %v483 = vmul.f32 %v311, 0.25
      %v484 = vmul.f32 %v318, 0.25
      %v485 = vmul.f32 %v325, 0.25
      %v486 = vmul.f32 %v332, 0.25
      %v487 = vmul.f32 %v339, 0.25
      %v488 = vmul.f32 %v346, 0.25
      %v489 = vmul.f32 %v353, 0.25
      %v490 = vmul.f32 %v360, 0.25
      %v491 = vmul.f32 %v367, 0.25
      %v492 = vmul.f32 %v374, 0.25
      %v493 = vmul.f32 %v381, 0.25
      %v494 = vmul.f32 %v388, 0.25
      %v495 = vmul.f32 %v395, 0.25
      %v496 = vmul.f32 %v402, 0.25
      %v497 = vmul.f32 %v409, 0.25
      %v498 = vmul.f32 %v416, 0.25
      %v499 = vmul.f32 %v423, 0.25
      %v500 = vmul.f32 %v430, 0.25
      %v501 = vmul.f32 %v437, 0.25
      %v502 = vmul.f32 %v444, 0.25
      %v503 = vmul.f32 %v451, 0.25
      %v504 = vmul.f32 %v458, 0.25
      %v505 = vmul.f32 %v465, 0.25
      %v506 = vmul.f32 %v472, 0.25
      %v507 = vmul.f32 %v479, 0.25
      %s508 = sadd.s32 %s17, 1
      %s509 = smul.u32 %s508, 2
      %s510 = smul.u32 %s509, 112
      %s511 = scalar_lea.vmem %s142, %s510
      %512 = vst [vmem:[%s511] sm:$0x7f] %v480
      %513 = vst [vmem:[%s511 + $0x8] sm:$0x7f] %v481
      %514 = vst [vmem:[%s511 + $0x10] sm:$0x7f] %v482
      %515 = vst [vmem:[%s511 + $0x18] sm:$0x7f] %v483
      %516 = vst [vmem:[%s511 + $0x20] sm:$0x7f] %v484
      %517 = vst [vmem:[%s511 + $0x28] sm:$0x7f] %v485
      %518 = vst [vmem:[%s511 + $0x30] sm:$0x7f] %v486
      %519 = vst [vmem:[%s511 + $0x38] sm:$0x7f] %v487
      %520 = vst [vmem:[%s511 + $0x40] sm:$0x7f] %v488
      %521 = vst [vmem:[%s511 + $0x48] sm:$0x7f] %v489
      %522 = vst [vmem:[%s511 + $0x50] sm:$0x7f] %v490
      %523 = vst [vmem:[%s511 + $0x58] sm:$0x7f] %v491
      %524 = vst [vmem:[%s511 + $0x60] sm:$0x7f] %v492
      %525 = vst [vmem:[%s511 + $0x68] sm:$0x7f] %v493
      %526 = vst [vmem:[%s511 + $0x70] sm:$0x7f] %v494
      %527 = vst [vmem:[%s511 + $0x78] sm:$0x7f] %v495
      %528 = vst [vmem:[%s511 + $0x80] sm:$0x7f] %v496
      %529 = vst [vmem:[%s511 + $0x88] sm:$0x7f] %v497
      %530 = vst [vmem:[%s511 + $0x90] sm:$0x7f] %v498
      %531 = vst [vmem:[%s511 + $0x98] sm:$0x7f] %v499
      %532 = vst [vmem:[%s511 + $0xa0] sm:$0x7f] %v500
      %533 = vst [vmem:[%s511 + $0xa8] sm:$0x7f] %v501
      %534 = vst [vmem:[%s511 + $0xb0] sm:$0x7f] %v502
      %535 = vst [vmem:[%s511 + $0xb8] sm:$0x7f] %v503
      %536 = vst [vmem:[%s511 + $0xc0] sm:$0x7f] %v504
      %537 = vst [vmem:[%s511 + $0xc8] sm:$0x7f] %v505
      %538 = vst [vmem:[%s511 + $0xd0] sm:$0x7f] %v506
      %539 = vst [vmem:[%s511 + $0xd8] sm:$0x7f] %v507
      %v540 = vsel %vm283, %v143, 0.0
      %v541 = vrot.slane %v540, 4
      %v542 = vadd.f32 %v540, %v541
      %v543 = vrot.slane %v542, 2
      %v544 = vadd.f32 %v542, %v543
      %v545 = vrot.slane %v544, 1
      %v546 = vadd.f32 %v544, %v545
      %v547 = vsel %vm283, %v144, 0.0
      %v548 = vrot.slane %v547, 4
      %v549 = vadd.f32 %v547, %v548
      %v550 = vrot.slane %v549, 2
      %v551 = vadd.f32 %v549, %v550
      %v552 = vrot.slane %v551, 1
      %v553 = vadd.f32 %v551, %v552
      %v554 = vsel %vm283, %v145, 0.0
      %v555 = vrot.slane %v554, 4
      %v556 = vadd.f32 %v554, %v555
      %v557 = vrot.slane %v556, 2
      %v558 = vadd.f32 %v556, %v557
      %v559 = vrot.slane %v558, 1
      %v560 = vadd.f32 %v558, %v559
      %v561 = vsel %vm283, %v146, 0.0
      %v562 = vrot.slane %v561, 4
      %v563 = vadd.f32 %v561, %v562
      %v564 = vrot.slane %v563, 2
      %v565 = vadd.f32 %v563, %v564
      %v566 = vrot.slane %v565, 1
      %v567 = vadd.f32 %v565, %v566
      %v568 = vsel %vm283, %v147, 0.0
      %v569 = vrot.slane %v568, 4
      %v570 = vadd.f32 %v568, %v569
      %v571 = vrot.slane %v570, 2
      %v572 = vadd.f32 %v570, %v571
      %v573 = vrot.slane %v572, 1
      %v574 = vadd.f32 %v572, %v573
      %v575 = vsel %vm283, %v148, 0.0
      %v576 = vrot.slane %v575, 4
      %v577 = vadd.f32 %v575, %v576
      %v578 = vrot.slane %v577, 2
      %v579 = vadd.f32 %v577, %v578
      %v580 = vrot.slane %v579, 1
      %v581 = vadd.f32 %v579, %v580
      %v582 = vsel %vm283, %v149, 0.0
      %v583 = vrot.slane %v582, 4
      %v584 = vadd.f32 %v582, %v583
      %v585 = vrot.slane %v584, 2
      %v586 = vadd.f32 %v584, %v585
      %v587 = vrot.slane %v586, 1
      %v588 = vadd.f32 %v586, %v587
      %v589 = vsel %vm283, %v150, 0.0
      %v590 = vrot.slane %v589, 4
      %v591 = vadd.f32 %v589, %v590
      %v592 = vrot.slane %v591, 2
      %v593 = vadd.f32 %v591, %v592
      %v594 = vrot.slane %v593, 1
      %v595 = vadd.f32 %v593, %v594
      %v596 = vsel %vm283, %v151, 0.0
      %v597 = vrot.slane %v596, 4
      %v598 = vadd.f32 %v596, %v597
      %v599 = vrot.slane %v598, 2
      %v600 = vadd.f32 %v598, %v599
      %v601 = vrot.slane %v600, 1
      %v602 = vadd.f32 %v600, %v601
      %v603 = vsel %vm283, %v152, 0.0
      %v604 = vrot.slane %v603, 4
      %v605 = vadd.f32 %v603, %v604
      %v606 = vrot.slane %v605, 2
      %v607 = vadd.f32 %v605, %v606
      %v608 = vrot.slane %v607, 1
      %v609 = vadd.f32 %v607, %v608
      %v610 = vsel %vm283, %v153, 0.0
      %v611 = vrot.slane %v610, 4
      %v612 = vadd.f32 %v610, %v611
      %v613 = vrot.slane %v612, 2
      %v614 = vadd.f32 %v612, %v613
      %v615 = vrot.slane %v614, 1
      %v616 = vadd.f32 %v614, %v615
      %v617 = vsel %vm283, %v154, 0.0
      %v618 = vrot.slane %v617, 4
      %v619 = vadd.f32 %v617, %v618
      %v620 = vrot.slane %v619, 2
      %v621 = vadd.f32 %v619, %v620
      %v622 = vrot.slane %v621, 1
      %v623 = vadd.f32 %v621, %v622
      %v624 = vsel %vm283, %v155, 0.0
      %v625 = vrot.slane %v624, 4
      %v626 = vadd.f32 %v624, %v625
      %v627 = vrot.slane %v626, 2
      %v628 = vadd.f32 %v626, %v627
      %v629 = vrot.slane %v628, 1
      %v630 = vadd.f32 %v628, %v629
      %v631 = vsel %vm283, %v156, 0.0
      %v632 = vrot.slane %v631, 4
      %v633 = vadd.f32 %v631, %v632
      %v634 = vrot.slane %v633, 2
      %v635 = vadd.f32 %v633, %v634
      %v636 = vrot.slane %v635, 1
      %v637 = vadd.f32 %v635, %v636
      %v638 = vsel %vm283, %v157, 0.0
      %v639 = vrot.slane %v638, 4
      %v640 = vadd.f32 %v638, %v639
      %v641 = vrot.slane %v640, 2
      %v642 = vadd.f32 %v640, %v641
      %v643 = vrot.slane %v642, 1
      %v644 = vadd.f32 %v642, %v643
      %v645 = vsel %vm283, %v158, 0.0
      %v646 = vrot.slane %v645, 4
      %v647 = vadd.f32 %v645, %v646
      %v648 = vrot.slane %v647, 2
      %v649 = vadd.f32 %v647, %v648
      %v650 = vrot.slane %v649, 1
      %v651 = vadd.f32 %v649, %v650
      %v652 = vsel %vm283, %v159, 0.0
      %v653 = vrot.slane %v652, 4
      %v654 = vadd.f32 %v652, %v653
      %v655 = vrot.slane %v654, 2
      %v656 = vadd.f32 %v654, %v655
      %v657 = vrot.slane %v656, 1
      %v658 = vadd.f32 %v656, %v657
      %v659 = vsel %vm283, %v160, 0.0
      %v660 = vrot.slane %v659, 4
      %v661 = vadd.f32 %v659, %v660
      %v662 = vrot.slane %v661, 2
      %v663 = vadd.f32 %v661, %v662
      %v664 = vrot.slane %v663, 1
      %v665 = vadd.f32 %v663, %v664
      %v666 = vsel %vm283, %v161, 0.0
      %v667 = vrot.slane %v666, 4
      %v668 = vadd.f32 %v666, %v667
      %v669 = vrot.slane %v668, 2
      %v670 = vadd.f32 %v668, %v669
      %v671 = vrot.slane %v670, 1
      %v672 = vadd.f32 %v670, %v671
      %v673 = vsel %vm283, %v162, 0.0
      %v674 = vrot.slane %v673, 4
      %v675 = vadd.f32 %v673, %v674
      %v676 = vrot.slane %v675, 2
      %v677 = vadd.f32 %v675, %v676
      %v678 = vrot.slane %v677, 1
      %v679 = vadd.f32 %v677, %v678
      %v680 = vsel %vm283, %v163, 0.0
      %v681 = vrot.slane %v680, 4
      %v682 = vadd.f32 %v680, %v681
      %v683 = vrot.slane %v682, 2
      %v684 = vadd.f32 %v682, %v683
      %v685 = vrot.slane %v684, 1
      %v686 = vadd.f32 %v684, %v685
      %v687 = vsel %vm283, %v164, 0.0
      %v688 = vrot.slane %v687, 4
      %v689 = vadd.f32 %v687, %v688
      %v690 = vrot.slane %v689, 2
      %v691 = vadd.f32 %v689, %v690
      %v692 = vrot.slane %v691, 1
      %v693 = vadd.f32 %v691, %v692
      %v694 = vsel %vm283, %v165, 0.0
      %v695 = vrot.slane %v694, 4
      %v696 = vadd.f32 %v694, %v695
      %v697 = vrot.slane %v696, 2
      %v698 = vadd.f32 %v696, %v697
      %v699 = vrot.slane %v698, 1
      %v700 = vadd.f32 %v698, %v699
      %v701 = vsel %vm283, %v166, 0.0
      %v702 = vrot.slane %v701, 4
      %v703 = vadd.f32 %v701, %v702
      %v704 = vrot.slane %v703, 2
      %v705 = vadd.f32 %v703, %v704
      %v706 = vrot.slane %v705, 1
      %v707 = vadd.f32 %v705, %v706
      %v708 = vsel %vm283, %v167, 0.0
      %v709 = vrot.slane %v708, 4
      %v710 = vadd.f32 %v708, %v709
      %v711 = vrot.slane %v710, 2
      %v712 = vadd.f32 %v710, %v711
      %v713 = vrot.slane %v712, 1
      %v714 = vadd.f32 %v712, %v713
      %v715 = vsel %vm283, %v168, 0.0
      %v716 = vrot.slane %v715, 4
      %v717 = vadd.f32 %v715, %v716
      %v718 = vrot.slane %v717, 2
      %v719 = vadd.f32 %v717, %v718
      %v720 = vrot.slane %v719, 1
      %v721 = vadd.f32 %v719, %v720
      %v722 = vsel %vm283, %v169, 0.0
      %v723 = vrot.slane %v722, 4
      %v724 = vadd.f32 %v722, %v723
      %v725 = vrot.slane %v724, 2
      %v726 = vadd.f32 %v724, %v725
      %v727 = vrot.slane %v726, 1
      %v728 = vadd.f32 %v726, %v727
      %v729 = vsel %vm283, %v170, 0.0
      %v730 = vrot.slane %v729, 4
      %v731 = vadd.f32 %v729, %v730
      %v732 = vrot.slane %v731, 2
      %v733 = vadd.f32 %v731, %v732
      %v734 = vrot.slane %v733, 1
      %v735 = vadd.f32 %v733, %v734
      %v736 = vadd.f32 %v546, %v560
      %v737 = vadd.f32 %v736, %v574
      %v738 = vadd.f32 %v737, %v588
      %v739 = vadd.f32 %v738, %v602
      %v740 = vadd.f32 %v739, %v616
      %v741 = vadd.f32 %v740, %v630
      %v742 = vadd.f32 %v553, %v567
      %v743 = vadd.f32 %v742, %v581
      %v744 = vadd.f32 %v743, %v595
      %v745 = vadd.f32 %v744, %v609
      %v746 = vadd.f32 %v745, %v623
      %v747 = vadd.f32 %v746, %v637
      %v748 = vadd.f32 %v644, %v658
      %v749 = vadd.f32 %v748, %v672
      %v750 = vadd.f32 %v749, %v686
      %v751 = vadd.f32 %v750, %v700
      %v752 = vadd.f32 %v751, %v714
      %v753 = vadd.f32 %v752, %v728
      %v754 = vadd.f32 %v651, %v665
      %v755 = vadd.f32 %v754, %v679
      %v756 = vadd.f32 %v755, %v693
      %v757 = vadd.f32 %v756, %v707
      %v758 = vadd.f32 %v757, %v721
      %v759 = vadd.f32 %v758, %v735
      %v760 = vmul.f32 %v741, 0.020408163
      %v761 = vmul.f32 %v747, 0.020408163
      %v762 = vmul.f32 %v753, 0.020408163
      %v763 = vmul.f32 %v759, 0.020408163
      %v764 = vmul.f32 %v760, %v760
      %v765 = vmul.f32 %v761, %v761
      %v766 = vmul.f32 %v762, %v762
      %v767 = vmul.f32 %v763, %v763
      %768 = vadd.xlane.f32.xlu0 %v764
      %v769 = vpop.xlane.xlu0 %768
      %770 = vadd.xlane.f32.xlu0 %v765
      %v771 = vpop.xlane.xlu0 %770
      %772 = vadd.xlane.f32.xlu0 %v766
      %v773 = vpop.xlane.xlu0 %772
      %774 = vadd.xlane.f32.xlu0 %v767
      %v775 = vpop.xlane.xlu0 %774
      %v776 = vadd.f32 %v769, 1e-12
      %v777 = vadd.f32 %v771, 1e-12
      %v778 = vadd.f32 %v773, 1e-12
      %v779 = vadd.f32 %v775, 1e-12
      %v780 = vrsqrt.pop %v776
      %v781 = vmul.f32 %v780, %v776
      %v782 = vmul.f32 %v781, %v780
      %v783 = vmul.f32 0.5, %v782
      %v784 = vsub.f32 1.5, %v783
      %v785 = vmul.f32 %v780, %v784
      %vm786 = vweird.f32 %v776
      %vm787 = vweird.f32 %v780
      %vm788 = vmor %vm786, %vm787
      %v789 = vsel %vm788, %v780, %v785
      %v790 = vrsqrt.pop %v777
      %v791 = vmul.f32 %v790, %v777
      %v792 = vmul.f32 %v791, %v790
      %v793 = vmul.f32 0.5, %v792
      %v794 = vsub.f32 1.5, %v793
      %v795 = vmul.f32 %v790, %v794
      %vm796 = vweird.f32 %v777
      %vm797 = vweird.f32 %v790
      %vm798 = vmor %vm796, %vm797
      %v799 = vsel %vm798, %v790, %v795
      %v800 = vrsqrt.pop %v778
      %v801 = vmul.f32 %v800, %v778
      %v802 = vmul.f32 %v801, %v800
      %v803 = vmul.f32 0.5, %v802
      %v804 = vsub.f32 1.5, %v803
      %v805 = vmul.f32 %v800, %v804
      %vm806 = vweird.f32 %v778
      %vm807 = vweird.f32 %v800
      %vm808 = vmor %vm806, %vm807
      %v809 = vsel %vm808, %v800, %v805
      %v810 = vrsqrt.pop %v779
      %v811 = vmul.f32 %v810, %v779
      %v812 = vmul.f32 %v811, %v810
      %v813 = vmul.f32 0.5, %v812
      %v814 = vsub.f32 1.5, %v813
      %v815 = vmul.f32 %v810, %v814
      %vm816 = vweird.f32 %v779
      %vm817 = vweird.f32 %v810
      %vm818 = vmor %vm816, %vm817
      %v819 = vsel %vm818, %v810, %v815
      %v820 = vmul.f32 %v760, %v789
      %v821 = vmul.f32 %v761, %v799
      %v822 = vmul.f32 %v762, %v809
      %v823 = vmul.f32 %v763, %v819
      %v824 = vadd.f32 %v820, %v821
      %v825 = vadd.f32 %v822, %v823
      %v826 = vadd.f32 %v824, %v825
      %v827 = vsub.f32 %v826, %v820
      %v828 = vsub.f32 %v826, %v821
      %v829 = vsub.f32 %v826, %v822
      %v830 = vsub.f32 %v826, %v823
      %v831 = vmul.f32 %v820, %v827
      %v832 = vmul.f32 %v821, %v828
      %v833 = vmul.f32 %v822, %v829
      %v834 = vmul.f32 %v823, %v830
      %835 = vadd.xlane.f32.xlu0 %v831
      %v836 = vpop.xlane.xlu0 %835
      %837 = vadd.xlane.f32.xlu0 %v832
      %v838 = vpop.xlane.xlu0 %837
      %839 = vadd.xlane.f32.xlu0 %v833
      %v840 = vpop.xlane.xlu0 %839
      %841 = vadd.xlane.f32.xlu0 %v834
      %v842 = vpop.xlane.xlu0 %841
      %p843 = scmp.eq.s32.totalorder %s17, 0
      // Predicated region
      $region25: #{pamd_forward.1} parent=23 // pred_check
        %p844 = pneg %p843
      $region26: #{pamd_forward.1} parent=23 // pred_check_branch
        %846 = sbr.rel (%p844) target = $region28
      $region27: #{pamd_forward.1} parent=23 // pred_region
        %847 = vst [vmem:[#allocation2] sm:$0x1] 0.0
        %848 = vst [vmem:[#allocation2 + $0x1] sm:$0x1] 0.0
        %849 = vst [vmem:[#allocation2 + $0x2] sm:$0x1] 0.0
        %850 = vst [vmem:[#allocation2 + $0x3] sm:$0x1] 0.0
        %vm851 = vcmask 0
        %852 = vst.msk [vmem:[#allocation3] sm:$0x1] %vm851, 0.0
        %853 = vst.msk [vmem:[#allocation3 + $0x1] sm:$0x1] %vm851, 0.0
        %854 = vst.msk [vmem:[#allocation3 + $0x2] sm:$0x1] %vm851, 0.0
        %855 = vst.msk [vmem:[#allocation3 + $0x3] sm:$0x1] %vm851, 0.0
      $region28: #{pamd_forward.1} parent=23 // pred_fallthru
        _
      %v856 = vld [vmem:[#allocation2] sm:$0x1]
      %v857 = vld [vmem:[#allocation2 + $0x1] sm:$0x1]
      %v858 = vld [vmem:[#allocation2 + $0x2] sm:$0x1]
      %v859 = vld [vmem:[#allocation2 + $0x3] sm:$0x1]
      %v860 = vadd.f32 %v856, %v760
      %v861 = vadd.f32 %v857, %v761
      %v862 = vadd.f32 %v858, %v762
      %v863 = vadd.f32 %v859, %v763
      %864 = vst [vmem:[#allocation2] sm:$0x1] %v860
      %865 = vst [vmem:[#allocation2 + $0x1] sm:$0x1] %v861
      %866 = vst [vmem:[#allocation2 + $0x2] sm:$0x1] %v862
      %867 = vst [vmem:[#allocation2 + $0x3] sm:$0x1] %v863
      %v868 = vld [vmem:[#allocation3] sm:$0x1]
      %v869 = vld [vmem:[#allocation3 + $0x1] sm:$0x1]
      %v870 = vld [vmem:[#allocation3 + $0x2] sm:$0x1]
      %v871 = vld [vmem:[#allocation3 + $0x3] sm:$0x1]
      %v872 = vadd.f32 %v868, %v836
      %v873 = vadd.f32 %v869, %v838
      %v874 = vadd.f32 %v870, %v840
      %v875 = vadd.f32 %v871, %v842
      %vm876 = vcmask 0
      %877 = vst.msk [vmem:[#allocation3] sm:$0x1] %vm876, %v872
      %878 = vst.msk [vmem:[#allocation3 + $0x1] sm:$0x1] %vm876, %v873
      %879 = vst.msk [vmem:[#allocation3 + $0x2] sm:$0x1] %vm876, %v874
      %880 = vst.msk [vmem:[#allocation3 + $0x3] sm:$0x1] %vm876, %v875
      %p881 = scmp.eq.s32.totalorder %s17, 3
      // Predicated region
      $region29: #{pamd_forward.1} parent=23 // pred_check
        %p882 = pneg %p881
      $region30: #{pamd_forward.1} parent=23 // pred_check_branch
        %884 = sbr.rel (%p882) target = $region32
      $region31: #{pamd_forward.1} parent=23 // pred_region
        %v885 = vld [vmem:[#allocation3] sm:$0x1]
        %v886 = vld [vmem:[#allocation3 + $0x1] sm:$0x1]
        %v887 = vld [vmem:[#allocation3 + $0x2] sm:$0x1]
        %v888 = vld [vmem:[#allocation3 + $0x3] sm:$0x1]
        %v889 = vlaneseq
        %vm890 = vcmp.ge.s32.totalorder %v889, 0
        %vm891 = vcmp.lt.s32.totalorder %v889, 1
        %vm892 = vmand %vm890, %vm891
        %v893 = vsel %vm892, %v885, -inf
        %v894 = vsel %vm892, %v886, -inf
        %v895 = vmax.f32 %v893, %v894
        %v896 = vsel %vm892, %v887, -inf
        %v897 = vsel %vm892, %v888, -inf
        %v898 = vmax.f32 %v896, %v897
        %v899 = vsel %vm892, %v895, -inf
        %v900 = vsel %vm892, %v898, -inf
        %v901 = vmax.f32 %v899, %v900
        %v902 = vsub.f32 %v885, %v901
        %v903 = vsub.f32 %v886, %v901
        %v904 = vsub.f32 %v887, %v901
        %v905 = vsub.f32 %v888, %v901
        %v906 = vmul.f32 %v902, 1.442695
        %v907 = vpow.pop %v906
        %v908 = vmul.f32 %v903, 1.442695
        %v909 = vpow.pop %v908
        %v910 = vmul.f32 %v904, 1.442695
        %v911 = vpow.pop %v910
        %v912 = vmul.f32 %v905, 1.442695
        %v913 = vpow.pop %v912
        %v914 = vsel %vm876, %v907, 0.0
        %v915 = vsel %vm876, %v909, 0.0
        %v916 = vadd.f32 %v914, %v915
        %v917 = vsel %vm876, %v911, 0.0
        %v918 = vsel %vm876, %v913, 0.0
        %v919 = vadd.f32 %v917, %v918
        %v920 = vsel %vm876, %v916, 0.0
        %v921 = vsel %vm876, %v919, 0.0
        %v922 = vadd.f32 %v920, %v921
        %v923 = vrcp.pop %v922
        %v924 = vmul.f32 %v922, %v923
        %v925 = vsub.f32 1.0, %v924
        %v926 = vmul.f32 %v923, %v925
        %v927 = vadd.f32 %v923, %v926
        %vm928 = vweird.f32 %v922
        %vm929 = vweird.f32 %v923
        %vm930 = vmor %vm928, %vm929
        %v931 = vsel %vm930, %v923, %v927
        %v932 = vand.u32 2147483647, %v922
        %vm933 = vcmp.eq.f32.partialorder %v932, 8.507059e+37
        %v934 = vand.u32 %v922, 2147483648
        %v935 = vor.u32 1.1754944e-38, %v934
        %v936 = vsel %vm933, %v935, %v931
        %v937 = vmul.f32 %v907, %v936
        %v938 = vmul.f32 %v909, %v936
        %v939 = vmul.f32 %v911, %v936
        %v940 = vmul.f32 %v913, %v936
        %v941 = vld [vmem:[#allocation2] sm:$0x1]
        %v942 = vld [vmem:[#allocation2 + $0x1] sm:$0x1]
        %v943 = vld [vmem:[#allocation2 + $0x2] sm:$0x1]
        %v944 = vld [vmem:[#allocation2 + $0x3] sm:$0x1]
        %946 = vset.pattern.permute.xlu0 0
        %947 = vperm.xlu0 %946, %v937
        %v948 = vpop.permute.xlu0 %947
        %v950 = vperm.slane %v948, 0
        %952 = vset.pattern.permute.xlu0 0
        %953 = vperm.xlu0 %952, %v938
        %v954 = vpop.permute.xlu0 %953
        %v956 = vperm.slane %v954, 0
        %958 = vset.pattern.permute.xlu0 0
        %959 = vperm.xlu0 %958, %v939
        %v960 = vpop.permute.xlu0 %959
        %v962 = vperm.slane %v960, 0
        %964 = vset.pattern.permute.xlu0 0
        %965 = vperm.xlu0 %964, %v940
        %v966 = vpop.permute.xlu0 %965
        %v968 = vperm.slane %v966, 0
        %v969 = vmul.f32 %v941, %v950
        %v970 = vmul.f32 %v942, %v956
        %v971 = vmul.f32 %v943, %v962
        %v972 = vmul.f32 %v944, %v968
        %v977 = vperm.slane %v969, 0
        %v978 = vperm.slane %v970, 0
        %v979 = vperm.slane %v971, 0
        %v980 = vperm.slane %v972, 0
        %985 = vst [vmem:[%s142] sm:$0x7f] %v977
        %986 = vst [vmem:[%s142 + $0x8] sm:$0x7f] %v978
        %987 = vst [vmem:[%s142 + $0x10] sm:$0x7f] %v977
        %988 = vst [vmem:[%s142 + $0x18] sm:$0x7f] %v978
        %989 = vst [vmem:[%s142 + $0x20] sm:$0x7f] %v977
        %990 = vst [vmem:[%s142 + $0x28] sm:$0x7f] %v978
        %991 = vst [vmem:[%s142 + $0x30] sm:$0x7f] %v977
        %992 = vst [vmem:[%s142 + $0x38] sm:$0x7f] %v978
        %993 = vst [vmem:[%s142 + $0x40] sm:$0x7f] %v977
        %994 = vst [vmem:[%s142 + $0x48] sm:$0x7f] %v978
        %995 = vst [vmem:[%s142 + $0x50] sm:$0x7f] %v977
        %996 = vst [vmem:[%s142 + $0x58] sm:$0x7f] %v978
        %997 = vst [vmem:[%s142 + $0x60] sm:$0x7f] %v977
        %998 = vst [vmem:[%s142 + $0x68] sm:$0x7f] %v978
        %999 = vst [vmem:[%s142 + $0x70] sm:$0x7f] %v979
        %1000 = vst [vmem:[%s142 + $0x78] sm:$0x7f] %v980
        %1001 = vst [vmem:[%s142 + $0x80] sm:$0x7f] %v979
        %1002 = vst [vmem:[%s142 + $0x88] sm:$0x7f] %v980
        %1003 = vst [vmem:[%s142 + $0x90] sm:$0x7f] %v979
        %1004 = vst [vmem:[%s142 + $0x98] sm:$0x7f] %v980
        %1005 = vst [vmem:[%s142 + $0xa0] sm:$0x7f] %v979
        %1006 = vst [vmem:[%s142 + $0xa8] sm:$0x7f] %v980
        %1007 = vst [vmem:[%s142 + $0xb0] sm:$0x7f] %v979
        %1008 = vst [vmem:[%s142 + $0xb8] sm:$0x7f] %v980
        %1009 = vst [vmem:[%s142 + $0xc0] sm:$0x7f] %v979
        %1010 = vst [vmem:[%s142 + $0xc8] sm:$0x7f] %v980
        %1011 = vst [vmem:[%s142 + $0xd0] sm:$0x7f] %v979
        %1012 = vst [vmem:[%s142 + $0xd8] sm:$0x7f] %v980
      $region32: #{pamd_forward.1} parent=23 // pred_fallthru
        _
      %p1013 = scmp.lt.s32.totalorder %s16, 1
      %s1014 = scalar_select %p1013, %s16, 1
      %s1015 = smul.addr %s1014, 140
      %s1016 = smul.addr %s1015, 8
      %s1017 = scalar_lea.vmem %s1, %s1016
      // Predicated region
      $region33: #{pamd_forward.1} parent=23 // pred_check
        %p1018 = pneg %p70
      $region34: #{pamd_forward.1} parent=23 // pred_check_branch
        %1020 = sbr.rel (%p1018) target = $region36
      $region35: #{pamd_forward.1} parent=23 // pred_region
        _
      $region36: #{pamd_forward.1} parent=23 // pred_fallthru
        _
    $region24: #{pamd_forward.1} parent=5 // pred_fallthru
      _
    %p1021 = scmp.le.s32.totalorder 2, %s7
    // Predicated region
    $region37: #{pamd_forward.1} parent=5 // pred_check
      %p1022 = pneg %p1021
    $region38: #{pamd_forward.1} parent=5 // pred_check_branch
      %1024 = sbr.rel (%p1022) target = $region40
    $region39: #{pamd_forward.1} parent=5 // pred_region
      %s1025 = ssub.s32 %s7, 2
      // Predicated region
      $region41: #{pamd_forward.1} parent=39 // pred_check
        %p1026 = pneg %p76
      $region42: #{pamd_forward.1} parent=39 // pred_check_branch
        %1028 = sbr.rel (%p1026) target = $region44
      $region43: #{pamd_forward.1} parent=39 // pred_region
        %p1029 = scmp.lt.s32.totalorder %s18, 1
        %s1030 = scalar_select %p1029, %s18, 1
        %s1031 = smul.addr %s1030, 140
        %s1032 = smul.addr %s1031, 8
        %s1033 = scalar_lea.vmem %s1, %s1032
      $region44: #{pamd_forward.1} parent=39 // pred_fallthru
        _
    $region40: #{pamd_forward.1} parent=5 // pred_fallthru
      _
  $region6: #{pamd_forward.1} parent=0 // loop_footer
    %s11 = sadd.s32 1, %s7
  $region7: #{pamd_forward.1} parent=0 // loop_footer_branch
    %6 = sbr.rel target = $region3
  $region8: #{pamd_forward.1} parent=0 // loop_exit
    _

</llo_original>
